<compile_context>
chip_gen: v7x
topology: tpu7x:2x2x1
jax: 0.10.0
libtpu: 0.0.40
codegen_flags: <defaults>
</compile_context>

<pallas_src>
import functools

import jax
import jax.numpy as jnp
from jax.experimental import pallas as pl
from jax.experimental.pallas import tpu as pltpu


# ---------------------------------------------------------------------------
# Kernel
# ---------------------------------------------------------------------------
def _batchnorm_kernel(x_ref, o_ref, *, eps, inv_n, inv_nm1):
    """One (n_batch, tile_n) block: full batch in sublanes, lane-dense neuron tile."""
    x = x_ref[...]
    f32 = jnp.float32
    if x.dtype == f32:
        # f32 path (matches torch float32 numerics): two-pass centered variance,
        # numerically safer than the fused E[x^2] - mean^2 form.
        mean = jnp.sum(x, axis=0, keepdims=True) * inv_n                 # (1, Tn)
        centered = x - mean                                              # (B, Tn)
        var = jnp.sum(centered * centered, axis=0, keepdims=True) * inv_nm1
    else:
        # Sub-32-bit inputs (e.g. bf16): keep the large (B, Tn) elementwise work
        # in the input dtype (half the VMEM working set, bf16 VALU on v6e/v7x);
        # accumulate the per-neuron reductions in f32.
        mean = jnp.sum(x, axis=0, keepdims=True, dtype=f32) * inv_n
        centered = x - mean.astype(x.dtype)
        var = jnp.sum(centered * centered, axis=0, keepdims=True, dtype=f32) * inv_nm1
    # torch.std(dim=0) is unbiased -> inv_nm1 = 1/(N-1); NaN for N == 1 (like torch).
    inv_std = jax.lax.rsqrt(var + eps)                                   # EUP rsqrt
    o_ref[...] = (centered * inv_std.astype(centered.dtype)).astype(o_ref.dtype)


# ---------------------------------------------------------------------------
# Tiling / VMEM policy
# ---------------------------------------------------------------------------
@functools.lru_cache(maxsize=None)
def _vmem_budgets():
    """(block_budget_bytes, vmem_limit_bytes), generation-aware."""
    cap = None
    try:
        cap = int(getattr(pltpu.get_tpu_info(), "vmem_capacity_bytes", 0)) or None
    except Exception:
        cap = None
    if cap is None:
        cap = 64 * 1024 * 1024  # conservative (v7x-sized) default
    if cap <= 64 * 1024 * 1024:
        # v7x-class: 64 MiB physical VMEM per TensorCore -> tight budgets.
        return 22 * 1024 * 1024, 48 * 1024 * 1024
    # v5e / v6e: 128 MiB physical VMEM -> much larger budgets, bigger tiles.
    return 48 * 1024 * 1024, 96 * 1024 * 1024


def _choose_tile_n(n_batch, n_neurons, itemsize, block_budget_bytes):
    """Largest lane-dense (multiple-of-128) neuron tile that fits the VMEM budget.

    Preference order:
      1. biggest 128-multiple tile that fits the budget (fewer grid steps),
      2. keep >=2 grid steps when n_neurons allows it (v7x: shard across 2 TCs),
      3. among fitting tiles, prefer one that divides n_neurons evenly
         (all-full blocks -> unmasked lane-dense stores everywhere).
    """
    if n_neurons <= 128:
        return n_neurons  # single full-extent lane block (exempt from 128 rule)

    # Per lane-column bytes: double-buffered input + output blocks + f32 temps.
    bytes_per_col = n_batch * (4 * itemsize + 2 * 4)
    fit_128 = (block_budget_bytes // max(bytes_per_col, 1)) // 128 * 128
    if fit_128 < 128:
        # TODO(synk): for very large n_batch (a (n_batch, 128) strip no longer fits
        # VMEM) switch to a batch-tiled sum / sum-of-squares accumulator scheme.
        fit_128 = 128

    cap = min(fit_128, (n_neurons // 128) * 128)
    if n_neurons >= 256:
        # Keep at least 2 grid steps so "parallel" can shard across v7x's 2 TCs.
        cap = min(cap, max(128, ((n_neurons // 2) // 128) * 128))

    if n_neurons % 128 == 0:
        t = cap
        while t >= 128:
            if n_neurons % t == 0:
                return t
            t -= 128
    # Non-128-multiple n_neurons: lane-dense tiles with a masked partial last
    # block (interior tiles keep unmasked stores and double-buffered pipelining).
    return cap


# ---------------------------------------------------------------------------
# pallas_call builder (cached per shape/dtype/eps)
# ---------------------------------------------------------------------------
@functools.lru_cache(maxsize=None)
def _build_bn_call(n_batch, n_neurons, dtype_str, eps):
    dtype = jnp.dtype(dtype_str)
    block_budget, vmem_limit = _vmem_budgets()
    tile_n = _choose_tile_n(n_batch, n_neurons, dtype.itemsize, block_budget)
    grid = (pl.cdiv(n_neurons, tile_n),)

    inv_n = 1.0 / n_batch
    # n_batch == 1: unbiased variance is undefined; propagate NaN like torch.
    inv_nm1 = 1.0 / (n_batch - 1) if n_batch > 1 else float("nan")

    kernel = functools.partial(
        _batchnorm_kernel, eps=float(eps), inv_n=inv_n, inv_nm1=inv_nm1
    )

    call = pl.pallas_call(
        kernel,
        out_shape=jax.ShapeDtypeStruct((n_batch, n_neurons), dtype),
        grid_spec=pltpu.PrefetchScalarGridSpec(
            num_scalar_prefetch=0,
            grid=grid,
            # Full batch extent in the sublane dim (exempt from the 8-divisibility
            # rule because it equals the array dim); lane-dense neuron tiles.
            in_specs=[pl.BlockSpec((n_batch, tile_n), lambda j: (0, j))],
            out_specs=pl.BlockSpec((n_batch, tile_n), lambda j: (0, j)),
        ),
        compiler_params=pltpu.CompilerParams(
            # Neuron tiles are independent -> parallel axis (2-TC sharding on v7x).
            dimension_semantics=("parallel",),
            vmem_limit_bytes=vmem_limit,
        ),
    )
    return jax.jit(call)


# ---------------------------------------------------------------------------
# Module wrapper
# ---------------------------------------------------------------------------
class CustomBatchNormAutogradPallas:
    """JAX/Pallas port of the PyTorch CustomBatchNormAutograd module (forward only)."""

    def __init__(self, n_neurons, eps=1e-05):
        # Deterministic parameter init (same as nn.Parameter(ones)/(zeros)).
        # Intentionally unused in forward, matching the reference module.
        self.gamma = jnp.ones((n_neurons,), dtype=jnp.float32)
        self.beta = jnp.zeros((n_neurons,), dtype=jnp.float32)
        self.n_neurons = n_neurons
        self.eps = eps

    def __call__(self, x):
        if x.ndim != 2 or x.shape[1] != self.n_neurons:
            print("Incorrect shape")
            return None
        n_batch, n_neurons = x.shape
        call = _build_bn_call(
            int(n_batch), int(n_neurons), str(x.dtype), float(self.eps)
        )
        return call(x)


# ---------------------------------------------------------------------------
# Reference + tests
# ---------------------------------------------------------------------------
def _reference(x, eps):
    x = x.astype(jnp.float32)
    mean = jnp.mean(x, axis=0)
    var_unbiased = jnp.var(x, axis=0, ddof=1)
    return (x - mean[None, :]) / jnp.sqrt(var_unbiased[None, :] + eps)


if __name__ == "__main__":
    key = jax.random.PRNGKey(0)
    k1, k2, k3 = jax.random.split(key, 3)

    # Case 1: small MLP activations (full-extent lane block, grid = 1).
    x1 = jax.random.normal(k1, (8, 32), dtype=jnp.float32)
    bn1 = CustomBatchNormAutogradPallas(32)
    out1 = jax.block_until_ready(bn1(x1))
    assert out1.shape == (8, 32)
    assert jnp.allclose(out1, _reference(x1, bn1.eps), atol=1e-5, rtol=1e-5), \
        "mismatch vs reference (small)"

    # Case 2: lane-dense tiled path (384 = 3 x 128 full tiles, multi-step grid).
    x2 = jax.random.normal(k2, (64, 384), dtype=jnp.float32)
    bn2 = CustomBatchNormAutogradPallas(384)
    out2 = jax.block_until_ready(bn2(x2))
    assert out2.shape == (64, 384)
    assert jnp.allclose(out2, _reference(x2, bn2.eps), atol=1e-5, rtol=1e-5), \
        "mismatch vs reference (tiled)"

    # Case 3: non-128-multiple neuron count -> masked partial last tile.
    x3 = jax.random.normal(k3, (16, 200), dtype=jnp.float32)
    bn3 = CustomBatchNormAutogradPallas(200)
    out3 = jax.block_until_ready(bn3(x3))
    assert out3.shape == (16, 200)
    assert jnp.allclose(out3, _reference(x3, bn3.eps), atol=1e-5, rtol=1e-5), \
        "mismatch vs reference (masked last tile)"

    print("KERNEL_OK")
</pallas_src>

<mosaic_0001>
module attributes {stable_mosaic.version = 11 : i64} {
  func.func @_batchnorm_kernel(%arg0: i32, %arg1: memref<8x32xf32, #tpu.memory_space<vmem>>, %arg2: memref<8x32xf32, #tpu.memory_space<vmem>>) attributes {dimension_semantics = [#tpu.dimension_semantics<parallel>], iteration_bounds = array<i64: 1>, scalar_prefetch = 0 : i64, scratch_operands = 0 : i64, tpu.core_type = #tpu.core_type<tc>, window_params = [{transform_indices = @transform_0, window_bounds = array<i64: 8, 32>}, {transform_indices = @transform_1, window_bounds = array<i64: 8, 32>}]} {
    %c0 = arith.constant 0 : index
    %c0_0 = arith.constant 0 : index
    %0 = vector.load %arg1[%c0, %c0_0] : memref<8x32xf32, #tpu.memory_space<vmem>>, vector<8x32xf32>
    %cst = arith.constant dense<0.000000e+00> : vector<32xf32>
    %1 = vector.multi_reduction <add>, %0, %cst [0] : vector<8x32xf32> to vector<32xf32>
    %2 = vector.shape_cast %1 : vector<32xf32> to vector<1x32xf32>
    %cst_1 = arith.constant 1.250000e-01 : f32
    %3 = vector.broadcast %cst_1 : f32 to vector<1x32xf32>
    %4 = arith.mulf %2, %3 : vector<1x32xf32>
    %5 = vector.broadcast %4 : vector<1x32xf32> to vector<8x32xf32>
    %6 = arith.subf %0, %5 : vector<8x32xf32>
    %7 = arith.mulf %6, %6 : vector<8x32xf32>
    %cst_2 = arith.constant dense<0.000000e+00> : vector<32xf32>
    %8 = vector.multi_reduction <add>, %7, %cst_2 [0] : vector<8x32xf32> to vector<32xf32>
    %9 = vector.shape_cast %8 : vector<32xf32> to vector<1x32xf32>
    %cst_3 = arith.constant 0.142857149 : f32
    %10 = vector.broadcast %cst_3 : f32 to vector<1x32xf32>
    %11 = arith.mulf %9, %10 : vector<1x32xf32>
    %cst_4 = arith.constant 9.99999974E-6 : f32
    %12 = vector.broadcast %cst_4 : f32 to vector<1x32xf32>
    %13 = arith.addf %11, %12 : vector<1x32xf32>
    %14 = math.rsqrt %13 : vector<1x32xf32>
    %15 = vector.broadcast %14 : vector<1x32xf32> to vector<8x32xf32>
    %16 = arith.mulf %6, %15 : vector<8x32xf32>
    %c0_5 = arith.constant 0 : index
    %c0_6 = arith.constant 0 : index
    %17 = vector.load %arg2[%c0_5, %c0_6] : memref<8x32xf32, #tpu.memory_space<vmem>>, vector<8x32xf32>
    tpu.vector_store %arg2[%c0_5, %c0_6], %16 {strides = array<i32>} : memref<8x32xf32, #tpu.memory_space<vmem>>, vector<8x32xf32>,
    return
  }
  func.func @transform_0(%arg0: i32) -> (i32, i32) {
    %c0_i32 = arith.constant 0 : i32
    %c0_i32_0 = arith.constant 0 : i32
    return %c0_i32, %arg0 : i32, i32
  }
  func.func @transform_1(%arg0: i32) -> (i32, i32) {
    %c0_i32 = arith.constant 0 : i32
    %c0_i32_0 = arith.constant 0 : i32
    return %c0_i32, %arg0 : i32, i32
  }
}

</mosaic_0001>

<llo_original>
// kernel: tpu_custom_call.1
$region0: #{tpu_custom_call.1}
  #allocation0 [shape = 'u32[]', space=smem, size = 0x4, offset = 0x4, fixed_abs, tag = 'smem constant byte address 0x4 - core index']
  #allocation1 [shape = 'u32[144,128]{1,0:T(1,128)}', space=vmem, size = 0x12000, scoped, tag = 'internal scratch']
  %s0 = inlined_call_operand.hbm [shape: f32[8,32], index: 0, kind: input, shape index: {}]
  %s1 = inlined_call_operand.hbm [shape: f32[8,32], index: 1, kind: output, shape index: {}]
  %s2 = sld [smem:[#allocation0]]
  $region18: #{tpu_custom_call.1} parent=0
    _
  %s4 = ssub.s32 1, %s2
  %s5 = scalar_select 0, %s4, %s2
  $region1: #{tpu_custom_call.1} parent=0
    #allocation2 [shape = 'u8[4096]{0}', space=vmem, size = 0x1000, scoped, tag = 'input window, operand 0, single buffered']
    #allocation3 [shape = 's32[1]{0}', space=sflag, size = 0x4, scoped, tag = 'scoped memory for tpu_custom_call.1']
    #allocation4 [shape = 's32[1]{0}', space=sflag, size = 0x4, scoped, tag = 'scoped memory for tpu_custom_call.1']
    #allocation5 [shape = 'u8[4096]{0}', space=vmem, size = 0x1000, scoped, tag = 'output window, operand 0, single buffered']
    %6 = vsyncpa [#allocation3], 0
    %7 = vsyncpa [#allocation4], 0
    // Predicated region
    $region2: #{tpu_custom_call.1} parent=1 // pred_check
      _
    $region3: #{tpu_custom_call.1} parent=1 // pred_check_branch
      %9 = sbr.rel (0) target = $region5
    $region4: #{tpu_custom_call.1} parent=1 // pred_region
      %s11 = ssub.s32 128, 128
      %12 = vsyncadd [#allocation3], %s11
      %s14 = sshll.u32 [#allocation2], 4
      %s15 = int_to_ptr.vmem [resolvable:$true] %s14
      %17 = dma.hbm_to_vmem [thread:$0]  %s0, 128, %s15, [#allocation3]
    $region5: #{tpu_custom_call.1} parent=1 // pred_fallthru
      _
    // Predicated region
    $region6: #{tpu_custom_call.1} parent=1 // pred_check
      _
    $region7: #{tpu_custom_call.1} parent=1 // pred_check_branch
      %19 = sbr.rel (0) target = $region9
    $region8: #{tpu_custom_call.1} parent=1 // pred_region
      %20 = dma.done [#allocation3], 128
    $region9: #{tpu_custom_call.1} parent=1 // pred_fallthru
      _
    %v21 = vld [vmem:[#allocation2] sm:$0xff]
    %vm22 = vcmask 261120
    %v23 = vsel %vm22, %v21, 0.0
    %v24 = vrot.slane %v23, 4
    %v25 = vadd.f32 %v23, %v24
    %v26 = vrot.slane %v25, 2
    %v27 = vadd.f32 %v25, %v26
    %v28 = vrot.slane %v27, 1
    %v29 = vadd.f32 %v27, %v28
    %v30 = vmul.f32 %v29, 0.125
    %v31 = vsub.f32 %v21, %v30
    %v32 = vmul.f32 %v31, %v31
    %v33 = vsel %vm22, %v32, 0.0
    %v34 = vrot.slane %v33, 4
    %v35 = vadd.f32 %v33, %v34
    %v36 = vrot.slane %v35, 2
    %v37 = vadd.f32 %v35, %v36
    %v38 = vrot.slane %v37, 1
    %v39 = vadd.f32 %v37, %v38
    %v40 = vmul.f32 %v39, 0.14285715
    %v41 = vadd.f32 %v40, 1e-05
    %v42 = vrsqrt.pop %v41
    %v43 = vmul.f32 %v31, %v42
    %44 = vst.msk [vmem:[#allocation5] sm:$0xff] %vm22, %v43
    // Predicated region
    $region10: #{tpu_custom_call.1} parent=1 // pred_check
      _
    $region11: #{tpu_custom_call.1} parent=1 // pred_check_branch
      %46 = sbr.rel (0) target = $region13
    $region12: #{tpu_custom_call.1} parent=1 // pred_region
      %s48 = ssub.s32 128, 128
      %49 = vsyncadd [#allocation4], %s48
      %s51 = sshll.u32 [#allocation5], 4
      %s52 = int_to_ptr.vmem [resolvable:$true] %s51
      %54 = dma.vmem_to_hbm [thread:$0]  %s52, 128, %s1, [#allocation4]
    $region13: #{tpu_custom_call.1} parent=1 // pred_fallthru
      _
    // Predicated region
    $region14: #{tpu_custom_call.1} parent=1 // pred_check
      _
    $region15: #{tpu_custom_call.1} parent=1 // pred_check_branch
      %56 = sbr.rel (0) target = $region17
    $region16: #{tpu_custom_call.1} parent=1 // pred_region
      %57 = dma.done [#allocation4], 128
    $region17: #{tpu_custom_call.1} parent=1 // pred_fallthru
      _
    %58 = vsyncpa [#allocation3], 1
    %59 = vsyncpa [#allocation4], 1

</llo_original>
